<compile_context>
chip_gen: v5e
topology: v5e:2x2
jax: 0.10.0
libtpu: 0.0.40
codegen_flags: <defaults>
</compile_context>

<pallas_src>
import jax
import jax.numpy as jnp
from jax.experimental import pallas as pl
from jax.experimental.pallas import tpu as pltpu  # noqa: F401  (TPU backend)


def comp_att_kernel(h_ref, roi_ref, ctx_ref, whT_ref, wvT_ref,
                    bias_ref, wa_ref, ba_ref, comp_ref, weight_ref):
    # Single program; everything resident in VMEM.
    #   h_ref    (B, 1, R)    roi_ref  (B, N, R)   ctx_ref (B, 1, R)
    #   whT_ref  (R, A)       wvT_ref  (R, A)
    #   bias_ref (1, A) = bh + bv      wa_ref (1, A)     ba_ref (1, 1)
    #   comp_ref (B, 1, R)    weight_ref (B, 1, N)
    B, N, R = roi_ref.shape
    A = whT_ref.shape[1]

    roi = roi_ref[...]                                   # (B, N, R)
    ctx = ctx_ref[...]                                   # (B, 1, R)
    h = h_ref[...]                                       # (B, 1, R)

    # Composition: context - roi (broadcast over the roi/sublane axis).
    feats = ctx - roi                                    # (B, N, R)

    # Pre-transposed weights, broadcast over the (tiny) batch dim; batched
    # contractions on the MXU.
    wvT = jnp.broadcast_to(wvT_ref[...][None], (B, R, A))
    whT = jnp.broadcast_to(whT_ref[...][None], (B, R, A))

    feats_p = jnp.einsum('bnr,bra->bna', feats, wvT,
                         preferred_element_type=jnp.float32)      # (B, N, A)
    h_p = jnp.einsum('bqr,bra->bqa', h, whT,
                     preferred_element_type=jnp.float32)          # (B, 1, A)
    h_p = h_p + bias_ref[...]                                     # bh + bv folded once

    dot = jnp.tanh(feats_p + h_p)                                 # (B, N, A)

    # wa projection -> attention logits with the roi axis on lanes: (B, 1, N).
    wa = jnp.broadcast_to(wa_ref[...][None], (B, 1, A))
    score = jnp.einsum('bqa,bna->bqn', wa, dot,
                       preferred_element_type=jnp.float32) + ba_ref[...]

    # Lane-major softmax over the roi axis.
    m = jnp.max(score, axis=-1, keepdims=True)                    # (B, 1, 1)
    e = jnp.exp(score - m)
    # Exact reciprocal keeps the 1e-5 weight tolerance (approx=True would move
    # this to the EUP but loosens precision).
    w = e * pl.reciprocal(jnp.sum(e, axis=-1, keepdims=True))     # (B, 1, N)

    # Weighted sum over rois: (B, 1, N) @ (B, N, R) -> (B, 1, R).
    comp = jnp.einsum('bqn,bnr->bqr', w, feats,
                      preferred_element_type=jnp.float32)

    comp_ref[...] = comp                                          # one full store
    weight_ref[...] = w                                           # one full store


def composition_attention(h, roi_feats, context_feat, params):
    B, N, R = roi_feats.shape
    A = params["wh_w"].shape[0]

    # Wrapper-side layout plumbing (one-time XLA ops, no compute hoisting):
    h3 = h.reshape(B, 1, R)
    ctx3 = context_feat.reshape(B, 1, R)
    whT = params["wh_w"].T                               # (R, A)
    wvT = params["wv_w"].T                               # (R, A)
    bias = (params["wh_b"] + params["wv_b"]).reshape(1, A)
    wa = params["wa_w"].reshape(1, A)
    ba = params["wa_b"].reshape(1, 1)

    comp3, weight3 = pl.pallas_call(
        comp_att_kernel,
        out_shape=(
            jax.ShapeDtypeStruct((B, 1, R), jnp.float32),
            jax.ShapeDtypeStruct((B, 1, N), jnp.float32),
        ),
    )(h3, roi_feats, ctx3, whT, wvT, bias, wa, ba)

    return comp3.reshape(B, R), weight3.reshape(B, N)


def reference_forward(h, roi_feats, context_feat, params):
    feats = context_feat[:, None, :] - roi_feats
    feats_ = feats @ params["wv_w"].T + params["wv_b"]
    dot = (h @ params["wh_w"].T + params["wh_b"])[:, None, :] + feats_
    score = jnp.tanh(dot) @ params["wa_w"].T + params["wa_b"]   # (B, N, 1)
    weight = jax.nn.softmax(score[..., 0], axis=1)               # (B, N)
    comp = jnp.einsum("bn,bnr->br", weight, feats)               # (B, R)
    return comp, weight


if __name__ == "__main__":
    # opt.rnn_size = 32, opt.att_hid_size = 32, batch = 2, num_rois = 8
    B, N, R, A = 2, 8, 32, 32

    key = jax.random.PRNGKey(0)
    k = jax.random.split(key, 9)

    h = jax.random.normal(k[0], (B, R), jnp.float32)
    roi_feats = jax.random.normal(k[1], (B, N, R), jnp.float32)
    context_feat = jax.random.normal(k[2], (B, R), jnp.float32)

    # Deterministic parameter init (PyTorch Linear-like shapes, scaled normals).
    params = {
        "wh_w": 0.1 * jax.random.normal(k[3], (A, R), jnp.float32),
        "wh_b": 0.1 * jax.random.normal(k[4], (A,), jnp.float32),
        "wv_w": 0.1 * jax.random.normal(k[5], (A, R), jnp.float32),
        "wv_b": 0.1 * jax.random.normal(k[6], (A,), jnp.float32),
        "wa_w": 0.1 * jax.random.normal(k[7], (1, A), jnp.float32),
        "wa_b": 0.1 * jax.random.normal(k[8], (1,), jnp.float32),
    }

    comp, weight = composition_attention(h, roi_feats, context_feat, params)
    comp = jax.block_until_ready(comp)
    weight = jax.block_until_ready(weight)

    comp_ref, weight_ref = reference_forward(h, roi_feats, context_feat, params)
    assert jnp.allclose(comp, comp_ref, atol=1e-4, rtol=1e-4)
    assert jnp.allclose(weight, weight_ref, atol=1e-5, rtol=1e-5)
    assert comp.shape == (B, R) and weight.shape == (B, N)

    print("KERNEL_OK")
</pallas_src>

<mosaic_0001>
module attributes {stable_mosaic.version = 11 : i64} {
  func.func @comp_att_kernel(%arg0: memref<2x1x32xf32, #tpu.memory_space<vmem>>, %arg1: memref<2x8x32xf32, #tpu.memory_space<vmem>>, %arg2: memref<2x1x32xf32, #tpu.memory_space<vmem>>, %arg3: memref<32x32xf32, #tpu.memory_space<vmem>>, %arg4: memref<32x32xf32, #tpu.memory_space<vmem>>, %arg5: memref<1x32xf32, #tpu.memory_space<vmem>>, %arg6: memref<1x32xf32, #tpu.memory_space<vmem>>, %arg7: memref<1x1xf32, #tpu.memory_space<vmem>>, %arg8: memref<2x1x32xf32, #tpu.memory_space<vmem>>, %arg9: memref<2x1x8xf32, #tpu.memory_space<vmem>>) attributes {dimension_semantics = [], scalar_prefetch = 0 : i64, scratch_operands = 0 : i64, tpu.core_type = #tpu.core_type<tc>} {
    %c0 = arith.constant 0 : index
    %c0_0 = arith.constant 0 : index
    %c0_1 = arith.constant 0 : index
    %0 = vector.load %arg1[%c0, %c0_0, %c0_1] : memref<2x8x32xf32, #tpu.memory_space<vmem>>, vector<2x8x32xf32>
    %c0_2 = arith.constant 0 : index
    %c0_3 = arith.constant 0 : index
    %c0_4 = arith.constant 0 : index
    %1 = vector.load %arg2[%c0_2, %c0_3, %c0_4] : memref<2x1x32xf32, #tpu.memory_space<vmem>>, vector<2x1x32xf32>
    %c0_5 = arith.constant 0 : index
    %c0_6 = arith.constant 0 : index
    %c0_7 = arith.constant 0 : index
    %2 = vector.load %arg0[%c0_5, %c0_6, %c0_7] : memref<2x1x32xf32, #tpu.memory_space<vmem>>, vector<2x1x32xf32>
    %3 = vector.broadcast %1 : vector<2x1x32xf32> to vector<2x8x32xf32>
    %4 = arith.subf %3, %0 : vector<2x8x32xf32>
    %c0_8 = arith.constant 0 : index
    %c0_9 = arith.constant 0 : index
    %5 = vector.load %arg4[%c0_8, %c0_9] : memref<32x32xf32, #tpu.memory_space<vmem>>, vector<32x32xf32>
    %6 = vector.shape_cast %5 : vector<32x32xf32> to vector<1x32x32xf32>
    %7 = vector.shape_cast %6 : vector<1x32x32xf32> to vector<1x32x32xf32>
    %8 = vector.broadcast %7 : vector<1x32x32xf32> to vector<2x32x32xf32>
    %c0_10 = arith.constant 0 : index
    %c0_11 = arith.constant 0 : index
    %9 = vector.load %arg3[%c0_10, %c0_11] : memref<32x32xf32, #tpu.memory_space<vmem>>, vector<32x32xf32>
    %10 = vector.shape_cast %9 : vector<32x32xf32> to vector<1x32x32xf32>
    %11 = vector.shape_cast %10 : vector<1x32x32xf32> to vector<1x32x32xf32>
    %12 = vector.broadcast %11 : vector<1x32x32xf32> to vector<2x32x32xf32>
    "tpu.trace_start"() <{level = 10 : i32, message = "bnr,bra->bna"}> : () -> ()
    %cst = arith.constant dense<0.000000e+00> : vector<2x8x32xf32>
    %13 = tpu.matmul %4, %8, %cst {dimension_numbers = #tpu.dot_dimension_numbers<[2], [1], [1], [2], [0, 0, 0, 1, 1, 2], [0], [0]>} : vector<2x8x32xf32>, vector<2x32x32xf32>, vector<2x8x32xf32> -> vector<2x8x32xf32>
    "tpu.trace_stop"() : () -> ()
    "tpu.trace_start"() <{level = 10 : i32, message = "bqr,bra->bqa"}> : () -> ()
    %cst_12 = arith.constant dense<0.000000e+00> : vector<2x1x32xf32>
    %14 = tpu.matmul %2, %12, %cst_12 {dimension_numbers = #tpu.dot_dimension_numbers<[2], [1], [1], [2], [0, 0, 0, 1, 1, 2], [0], [0]>} : vector<2x1x32xf32>, vector<2x32x32xf32>, vector<2x1x32xf32> -> vector<2x1x32xf32>
    "tpu.trace_stop"() : () -> ()
    %c0_13 = arith.constant 0 : index
    %c0_14 = arith.constant 0 : index
    %15 = vector.load %arg5[%c0_13, %c0_14] : memref<1x32xf32, #tpu.memory_space<vmem>>, vector<1x32xf32>
    %16 = vector.shape_cast %15 : vector<1x32xf32> to vector<1x1x32xf32>
    %17 = vector.broadcast %16 : vector<1x1x32xf32> to vector<2x1x32xf32>
    %18 = arith.addf %14, %17 : vector<2x1x32xf32>
    %19 = vector.broadcast %18 : vector<2x1x32xf32> to vector<2x8x32xf32>
    %20 = arith.addf %13, %19 : vector<2x8x32xf32>
    %21 = math.tanh %20 : vector<2x8x32xf32>
    %c0_15 = arith.constant 0 : index
    %c0_16 = arith.constant 0 : index
    %22 = vector.load %arg6[%c0_15, %c0_16] : memref<1x32xf32, #tpu.memory_space<vmem>>, vector<1x32xf32>
    %23 = vector.shape_cast %22 : vector<1x32xf32> to vector<1x1x32xf32>
    %24 = vector.shape_cast %23 : vector<1x1x32xf32> to vector<1x1x32xf32>
    %25 = vector.broadcast %24 : vector<1x1x32xf32> to vector<2x1x32xf32>
    "tpu.trace_start"() <{level = 10 : i32, message = "bqa,bna->bqn"}> : () -> ()
    %cst_17 = arith.constant dense<0.000000e+00> : vector<2x1x8xf32>
    %26 = tpu.matmul %25, %21, %cst_17 {dimension_numbers = #tpu.dot_dimension_numbers<[2], [2], [1], [1], [0, 0, 0, 1, 1, 1], [0], [0]>} : vector<2x1x32xf32>, vector<2x8x32xf32>, vector<2x1x8xf32> -> vector<2x1x8xf32>
    "tpu.trace_stop"() : () -> ()
    %c0_18 = arith.constant 0 : index
    %c0_19 = arith.constant 0 : index
    %27 = vector.load %arg7[%c0_18, %c0_19] : memref<1x1xf32, #tpu.memory_space<vmem>>, vector<1x1xf32>
    %28 = vector.shape_cast %27 : vector<1x1xf32> to vector<1x1x1xf32>
    %29 = vector.broadcast %28 : vector<1x1x1xf32> to vector<2x1x8xf32>
    %30 = arith.addf %26, %29 : vector<2x1x8xf32>
    %cst_20 = arith.constant dense<0xFF800000> : vector<2x1xf32>
    %31 = vector.multi_reduction <maximumf>, %30, %cst_20 [2] : vector<2x1x8xf32> to vector<2x1xf32>
    %32 = vector.shape_cast %31 : vector<2x1xf32> to vector<2x1x1xf32>
    %33 = vector.broadcast %32 : vector<2x1x1xf32> to vector<2x1x8xf32>
    %34 = arith.subf %30, %33 : vector<2x1x8xf32>
    %35 = math.exp %34 : vector<2x1x8xf32>
    %cst_21 = arith.constant dense<0.000000e+00> : vector<2x1xf32>
    %36 = vector.multi_reduction <add>, %35, %cst_21 [2] : vector<2x1x8xf32> to vector<2x1xf32>
    %37 = vector.shape_cast %36 : vector<2x1xf32> to vector<2x1x1xf32>
    %38 = tpu.reciprocal %37 : vector<2x1x1xf32> -> vector<2x1x1xf32>
    %39 = vector.broadcast %38 : vector<2x1x1xf32> to vector<2x1x8xf32>
    %40 = arith.mulf %35, %39 : vector<2x1x8xf32>
    "tpu.trace_start"() <{level = 10 : i32, message = "bqn,bnr->bqr"}> : () -> ()
    %cst_22 = arith.constant dense<0.000000e+00> : vector<2x1x32xf32>
    %41 = tpu.matmul %40, %4, %cst_22 {dimension_numbers = #tpu.dot_dimension_numbers<[2], [1], [1], [2], [0, 0, 0, 1, 1, 2], [0], [0]>} : vector<2x1x8xf32>, vector<2x8x32xf32>, vector<2x1x32xf32> -> vector<2x1x32xf32>
    "tpu.trace_stop"() : () -> ()
    %c0_23 = arith.constant 0 : index
    %c0_24 = arith.constant 0 : index
    %c0_25 = arith.constant 0 : index
    %42 = vector.load %arg8[%c0_23, %c0_24, %c0_25] : memref<2x1x32xf32, #tpu.memory_space<vmem>>, vector<2x1x32xf32>
    tpu.vector_store %arg8[%c0_23, %c0_24, %c0_25], %41 {strides = array<i32>} : memref<2x1x32xf32, #tpu.memory_space<vmem>>, vector<2x1x32xf32>,
    %c0_26 = arith.constant 0 : index
    %c0_27 = arith.constant 0 : index
    %c0_28 = arith.constant 0 : index
    %43 = vector.load %arg9[%c0_26, %c0_27, %c0_28] : memref<2x1x8xf32, #tpu.memory_space<vmem>>, vector<2x1x8xf32>
    tpu.vector_store %arg9[%c0_26, %c0_27, %c0_28], %40 {strides = array<i32>} : memref<2x1x8xf32, #tpu.memory_space<vmem>>, vector<2x1x8xf32>,
    return
  }
}

</mosaic_0001>

<llo_original>
// kernel: tpu_custom_call.1
$region0: #{tpu_custom_call.1}
  #allocation0 [shape = 'u32[]', space=smem, size = 0x4, offset = 0x4, fixed_abs, tag = 'smem constant byte address 0x4 - core index']
  #allocation1 [shape = 'u32[72,128]{1,0:T(1,128)}', space=vmem, size = 0x9000, scoped, tag = 'internal scratch']
  #allocation2 [shape = 'f32[1,1]{1,0:T(1,128)S(1)}', space=vmem, size = 0x200, scoped, tag = 'scoped memory for tpu_custom_call.1']
  %s0 = inlined_call_operand.vmem [shape: f32[2,1,32], index: 0, kind: input, shape index: {}]
  %s1 = inlined_call_operand.hbm [shape: f32[2,8,32], index: 1, kind: input, shape index: {}]
  %s2 = inlined_call_operand.hbm [shape: f32[2,1,32], index: 2, kind: input, shape index: {}]
  %s3 = inlined_call_operand.hbm [shape: f32[32,32], index: 3, kind: input, shape index: {}]
  %s4 = inlined_call_operand.hbm [shape: f32[32,32], index: 4, kind: input, shape index: {}]
  %s5 = inlined_call_operand.vmem [shape: f32[1,32], index: 5, kind: input, shape index: {}]
  %s6 = inlined_call_operand.vmem [shape: f32[1,32], index: 6, kind: input, shape index: {}]
  %s7 = inlined_call_operand.<no memory space> [shape: f32[1,1], index: 7, kind: input, shape index: {}]
  %s8 = inlined_call_operand.hbm [shape: f32[2,1,32], index: 8, kind: output, shape index: {0}]
  %s9 = inlined_call_operand.hbm [shape: f32[2,1,8], index: 9, kind: output, shape index: {1}]
  %10 = xla_tuple %s8, %s9
  %s11 = sld [smem:[#allocation0]]
  $region66: #{tpu_custom_call.1} parent=0
    _
  %s13 = ssub.s32 1, %s11
  %s14 = scalar_select 0, %s13, %s11
  %v15 = vstv %s7
  %16 = vst [vmem:[#allocation2] sm:$0x1] %v15
  $region1: #{tpu_custom_call.1} parent=0
    #allocation3 [shape = 'u8[8192]{0}', space=vmem, size = 0x2000, scoped, tag = 'input window, operand 1, single buffered']
    #allocation4 [shape = 's32[1]{0}', space=sflag, size = 0x4, scoped, tag = 'scoped memory for tpu_custom_call.1']
    #allocation5 [shape = 's32[1]{0}', space=sflag, size = 0x4, scoped, tag = 'scoped memory for tpu_custom_call.1']
    #allocation6 [shape = 'u8[1024]{0}', space=vmem, size = 0x400, scoped, tag = 'input window, operand 2, single buffered']
    #allocation7 [shape = 's32[1]{0}', space=sflag, size = 0x4, scoped, tag = 'scoped memory for tpu_custom_call.1']
    #allocation8 [shape = 'u8[16384]{0}', space=vmem, size = 0x4000, scoped, tag = 'input window, operand 3, single buffered']
    #allocation9 [shape = 'u8[16384]{0}', space=vmem, size = 0x4000, scoped, tag = 'input window, operand 4, single buffered']
    #allocation10 [shape = 's32[1]{0}', space=sflag, size = 0x4, scoped, tag = 'scoped memory for tpu_custom_call.1']
    #allocation11 [shape = 'u8[1024]{0}', space=vmem, size = 0x400, scoped, tag = 'output window, operand 0, single buffered']
    #allocation12 [shape = 'u8[1024]{0}', space=vmem, size = 0x400, scoped, tag = 'output window, operand 1, single buffered']
    #allocation13 [shape = 's32[1]{0}', space=sflag, size = 0x4, scoped, tag = 'scoped memory for tpu_custom_call.1']
    %17 = vsyncpa [#allocation4], 0
    %18 = vsyncpa [#allocation7], 0
    %19 = vsyncpa [#allocation10], 0
    %20 = vsyncpa [#allocation5], 0
    %21 = vsyncpa [#allocation13], 0
    // Predicated region
    $region2: #{tpu_custom_call.1} parent=1 // pred_check
      _
    $region3: #{tpu_custom_call.1} parent=1 // pred_check_branch
      %23 = sbr.rel (0) target = $region5
    $region4: #{tpu_custom_call.1} parent=1 // pred_region
      _
    $region5: #{tpu_custom_call.1} parent=1 // pred_fallthru
      _
    // Predicated region
    $region6: #{tpu_custom_call.1} parent=1 // pred_check
      _
    $region7: #{tpu_custom_call.1} parent=1 // pred_check_branch
      %25 = sbr.rel (0) target = $region9
    $region8: #{tpu_custom_call.1} parent=1 // pred_region
      %27 = vsyncadd [#allocation4], 0
      %s28 = sshll.u32 %s1, 4
      %s29 = int_to_ptr.hbm [resolvable:$true] %s28
      %s30 = sshll.u32 [#allocation3], 4
      %s31 = int_to_ptr.vmem [resolvable:$true] %s30
      %36 = dma.hbm_to_vmem [thread:$0]  %s29, 256, %s31, [#allocation4], 128, 128, 8
    $region9: #{tpu_custom_call.1} parent=1 // pred_fallthru
      _
    // Predicated region
    $region10: #{tpu_custom_call.1} parent=1 // pred_check
      _
    $region11: #{tpu_custom_call.1} parent=1 // pred_check_branch
      %38 = sbr.rel (0) target = $region13
    $region12: #{tpu_custom_call.1} parent=1 // pred_region
      %40 = vsyncadd [#allocation7], 0
      %s41 = sshll.u32 %s2, 4
      %s42 = int_to_ptr.hbm [resolvable:$true] %s41
      %s43 = sshll.u32 [#allocation6], 4
      %s44 = int_to_ptr.vmem [resolvable:$true] %s43
      %49 = dma.hbm_to_vmem [thread:$0]  %s42, 32, %s44, [#allocation7], 16, 16, 1
    $region13: #{tpu_custom_call.1} parent=1 // pred_fallthru
      _
    // Predicated region
    $region14: #{tpu_custom_call.1} parent=1 // pred_check
      _
    $region15: #{tpu_custom_call.1} parent=1 // pred_check_branch
      %51 = sbr.rel (0) target = $region17
    $region16: #{tpu_custom_call.1} parent=1 // pred_region
      %53 = vsyncadd [#allocation7], 0
      %s54 = sshll.u32 %s3, 4
      %s55 = int_to_ptr.hbm [resolvable:$true] %s54
      %s56 = sshll.u32 [#allocation8], 4
      %s57 = int_to_ptr.vmem [resolvable:$true] %s56
      %62 = dma.hbm_to_vmem [thread:$0]  %s55, 512, %s57, [#allocation7], 128, 128, 8
    $region17: #{tpu_custom_call.1} parent=1 // pred_fallthru
      _
    // Predicated region
    $region18: #{tpu_custom_call.1} parent=1 // pred_check
      _
    $region19: #{tpu_custom_call.1} parent=1 // pred_check_branch
      %64 = sbr.rel (0) target = $region21
    $region20: #{tpu_custom_call.1} parent=1 // pred_region
      %66 = vsyncadd [#allocation10], 0
      %s67 = sshll.u32 %s4, 4
      %s68 = int_to_ptr.hbm [resolvable:$true] %s67
      %s69 = sshll.u32 [#allocation9], 4
      %s70 = int_to_ptr.vmem [resolvable:$true] %s69
      %75 = dma.hbm_to_vmem [thread:$0]  %s68, 512, %s70, [#allocation10], 128, 128, 8
    $region21: #{tpu_custom_call.1} parent=1 // pred_fallthru
      _
    // Predicated region
    $region22: #{tpu_custom_call.1} parent=1 // pred_check
      _
    $region23: #{tpu_custom_call.1} parent=1 // pred_check_branch
      %77 = sbr.rel (0) target = $region25
    $region24: #{tpu_custom_call.1} parent=1 // pred_region
      _
    $region25: #{tpu_custom_call.1} parent=1 // pred_fallthru
      _
    // Predicated region
    $region26: #{tpu_custom_call.1} parent=1 // pred_check
      _
    $region27: #{tpu_custom_call.1} parent=1 // pred_check_branch
      %79 = sbr.rel (0) target = $region29
    $region28: #{tpu_custom_call.1} parent=1 // pred_region
      _
    $region29: #{tpu_custom_call.1} parent=1 // pred_fallthru
      _
    // Predicated region
    $region30: #{tpu_custom_call.1} parent=1 // pred_check
      _
    $region31: #{tpu_custom_call.1} parent=1 // pred_check_branch
      %81 = sbr.rel (0) target = $region33
    $region32: #{tpu_custom_call.1} parent=1 // pred_region
      _
    $region33: #{tpu_custom_call.1} parent=1 // pred_fallthru
      _
    // Predicated region
    $region34: #{tpu_custom_call.1} parent=1 // pred_check
      _
    $region35: #{tpu_custom_call.1} parent=1 // pred_check_branch
      %83 = sbr.rel (0) target = $region37
    $region36: #{tpu_custom_call.1} parent=1 // pred_region
      %85 = dma.done [#allocation4], 256
    $region37: #{tpu_custom_call.1} parent=1 // pred_fallthru
      _
    // Predicated region
    $region38: #{tpu_custom_call.1} parent=1 // pred_check
      _
    $region39: #{tpu_custom_call.1} parent=1 // pred_check_branch
      %87 = sbr.rel (0) target = $region41
    $region40: #{tpu_custom_call.1} parent=1 // pred_region
      %89 = dma.done [#allocation7], 32
    $region41: #{tpu_custom_call.1} parent=1 // pred_fallthru
      _
    // Predicated region
    $region42: #{tpu_custom_call.1} parent=1 // pred_check
      _
    $region43: #{tpu_custom_call.1} parent=1 // pred_check_branch
      %91 = sbr.rel (0) target = $region45
    $region44: #{tpu_custom_call.1} parent=1 // pred_region
      %93 = dma.done [#allocation7], 512
    $region45: #{tpu_custom_call.1} parent=1 // pred_fallthru
      _
    // Predicated region
    $region46: #{tpu_custom_call.1} parent=1 // pred_check
      _
    $region47: #{tpu_custom_call.1} parent=1 // pred_check_branch
      %95 = sbr.rel (0) target = $region49
    $region48: #{tpu_custom_call.1} parent=1 // pred_region
      %97 = dma.done [#allocation10], 512
    $region49: #{tpu_custom_call.1} parent=1 // pred_fallthru
      _
    %v98 = vld [vmem:[#allocation3] sm:$0xff]
    %v99 = vld [vmem:[#allocation3 + $0x8] sm:$0xff]
    %v100 = vld [vmem:[#allocation6] sm:$0x1]
    %v101 = vld [vmem:[#allocation6 + $0x1] sm:$0x1]
    %v102 = vld [vmem:[%s0] sm:$0x1]
    %v103 = vld [vmem:[%s0 + $0x1] sm:$0x1]
    %v106 = vperm.slane %v100, 0
    %v107 = vperm.slane %v101, 0
    %v110 = vsub.f32 %v106, %v98
    %v111 = vsub.f32 %v107, %v99
    %v112 = vld [vmem:[#allocation9] sm:$0xff]
    %v113 = vld [vmem:[#allocation9 + $0x8] sm:$0xff]
    %v114 = vld [vmem:[#allocation9 + $0x10] sm:$0xff]
    %v115 = vld [vmem:[#allocation9 + $0x18] sm:$0xff]
    %v116 = vld [vmem:[#allocation8] sm:$0xff]
    %v117 = vld [vmem:[#allocation8 + $0x8] sm:$0xff]
    %v118 = vld [vmem:[#allocation8 + $0x10] sm:$0xff]
    %v119 = vld [vmem:[#allocation8 + $0x18] sm:$0xff]
    %v120 = vld [vmem:[%s5] sm:$0x1]
    %vm121 = vcmask 261120
    %v123 = vsel %vm121, %v102, 0
    %125 = vmatpush.msra.mxu0 0.0
    %126 = vmatpush.msra.mxu0 0.0
    %127 = vmatpush.msra.mxu0 0.0
    %128 = vmatpush.msra.mxu0 0.0
    %129 = vmatpush.msra.mxu0 0.0
    %130 = vmatpush.msra.mxu0 0.0
    %131 = vmatpush.msra.mxu0 0.0
    %132 = vmatpush.msra.mxu0 0.0
    %133 = vmatpush.msra.mxu0 0.0
    %134 = vmatpush.msra.mxu0 0.0
    %135 = vmatpush.msra.mxu0 0.0
    %136 = vmatpush.msra.mxu0 0.0
    %137 = vmatpush.msra.mxu0 %v119
    %138 = vmatpush.msra.mxu0 %v118
    %139 = vmatpush.msra.mxu0 %v117
    %140 = vmatpush.msra.mxu0 %v116
    %141 = vmatmul.f32.gmra.mxu0 %v123
    %v142 = vpop.f32.mrf.mxu0
    %v143 = vadd.f32 %v120, %v142
    %144 = vdwg.mxu0
    %v146 = vsel %vm121, %v103, 0
    %148 = vmatpush.msra.mxu0 0.0
    %149 = vmatpush.msra.mxu0 0.0
    %150 = vmatpush.msra.mxu0 0.0
    %151 = vmatpush.msra.mxu0 0.0
    %152 = vmatpush.msra.mxu0 0.0
    %153 = vmatpush.msra.mxu0 0.0
    %154 = vmatpush.msra.mxu0 0.0
    %155 = vmatpush.msra.mxu0 0.0
    %156 = vmatpush.msra.mxu0 0.0
    %157 = vmatpush.msra.mxu0 0.0
    %158 = vmatpush.msra.mxu0 0.0
    %159 = vmatpush.msra.mxu0 0.0
    %160 = vmatpush.msra.mxu0 %v119
    %161 = vmatpush.msra.mxu0 %v118
    %162 = vmatpush.msra.mxu0 %v117
    %163 = vmatpush.msra.mxu0 %v116
    %164 = vmatmul.f32.gmra.mxu0 %v146
    %v165 = vpop.f32.mrf.mxu0
    %v166 = vadd.f32 %v120, %v165
    %167 = vdwg.mxu0
    %v168 = vperm.slane %v143, 0
    %v169 = vperm.slane %v166, 0
    %v171 = vsel %vm121, %v110, 0
    %173 = vmatpush.msra.mxu0 0.0
    %174 = vmatpush.msra.mxu0 0.0
    %175 = vmatpush.msra.mxu0 0.0
    %176 = vmatpush.msra.mxu0 0.0
    %177 = vmatpush.msra.mxu0 0.0
    %178 = vmatpush.msra.mxu0 0.0
    %179 = vmatpush.msra.mxu0 0.0
    %180 = vmatpush.msra.mxu0 0.0
    %181 = vmatpush.msra.mxu0 0.0
    %182 = vmatpush.msra.mxu0 0.0
    %183 = vmatpush.msra.mxu0 0.0
    %184 = vmatpush.msra.mxu0 0.0
    %185 = vmatpush.msra.mxu0 %v115
    %186 = vmatpush.msra.mxu0 %v114
    %187 = vmatpush.msra.mxu0 %v113
    %188 = vmatpush.msra.mxu0 %v112
    %189 = vmatmul.f32.gmra.mxu0 %v171
    %v190 = vpop.f32.mrf.mxu0
    %v191 = vadd.f32 %v168, %v190
    %192 = vdwg.mxu0
    %v194 = vsel %vm121, %v111, 0
    %196 = vmatpush.msra.mxu0 0.0
    %197 = vmatpush.msra.mxu0 0.0
    %198 = vmatpush.msra.mxu0 0.0
    %199 = vmatpush.msra.mxu0 0.0
    %200 = vmatpush.msra.mxu0 0.0
    %201 = vmatpush.msra.mxu0 0.0
    %202 = vmatpush.msra.mxu0 0.0
    %203 = vmatpush.msra.mxu0 0.0
    %204 = vmatpush.msra.mxu0 0.0
    %205 = vmatpush.msra.mxu0 0.0
    %206 = vmatpush.msra.mxu0 0.0
    %207 = vmatpush.msra.mxu0 0.0
    %208 = vmatpush.msra.mxu0 %v115
    %209 = vmatpush.msra.mxu0 %v114
    %210 = vmatpush.msra.mxu0 %v113
    %211 = vmatpush.msra.mxu0 %v112
    %212 = vmatmul.f32.gmra.mxu0 %v194
    %v213 = vpop.f32.mrf.mxu0
    %v214 = vadd.f32 %v169, %v213
    %215 = vdwg.mxu0
    %v216 = vtanh.pop %v191
    %v217 = vtanh.pop %v214
    %v218 = vld [vmem:[%s6] sm:$0x1]
    %v219 = vld [vmem:[#allocation2] sm:$0x1]
    %221 = vset.pattern.permute.xlu0 0
    %222 = vperm.xlu0 %221, %v219
    %v223 = vpop.permute.xlu0 %222
    %v225 = vperm.slane %v223, 0
    %v227 = vsel %vm121, %v218, 0
    %v230 = vsel %vm121, %v216, 0
    %232 = vmatpush.xpose.msra.mxu0 0.0
    %233 = vmatpush.xpose.msra.mxu0 0.0
    %234 = vmatpush.xpose.msra.mxu0 0.0
    %235 = vmatpush.xpose.msra.mxu0 0.0
    %236 = vmatpush.xpose.msra.mxu0 0.0
    %237 = vmatpush.xpose.msra.mxu0 0.0
    %238 = vmatpush.xpose.msra.mxu0 0.0
    %239 = vmatpush.xpose.msra.mxu0 0.0
    %240 = vmatpush.xpose.msra.mxu0 0.0
    %241 = vmatpush.xpose.msra.mxu0 0.0
    %242 = vmatpush.xpose.msra.mxu0 0.0
    %243 = vmatpush.xpose.msra.mxu0 0.0
    %244 = vmatpush.xpose.msra.mxu0 0.0
    %245 = vmatpush.xpose.msra.mxu0 0.0
    %246 = vmatpush.xpose.msra.mxu0 0.0
    %247 = vmatpush.xpose.msra.mxu0 %v230
    %248 = vmatmul.f32.gmra.mxu0 %v227
    %v249 = vpop.f32.mrf.mxu0
    %v250 = vadd.f32 %v225, %v249
    %251 = vdwg.mxu0
    %v253 = vsel %vm121, %v217, 0
    %255 = vmatpush.xpose.msra.mxu0 0.0
    %256 = vmatpush.xpose.msra.mxu0 0.0
    %257 = vmatpush.xpose.msra.mxu0 0.0
    %258 = vmatpush.xpose.msra.mxu0 0.0
    %259 = vmatpush.xpose.msra.mxu0 0.0
    %260 = vmatpush.xpose.msra.mxu0 0.0
    %261 = vmatpush.xpose.msra.mxu0 0.0
    %262 = vmatpush.xpose.msra.mxu0 0.0
    %263 = vmatpush.xpose.msra.mxu0 0.0
    %264 = vmatpush.xpose.msra.mxu0 0.0
    %265 = vmatpush.xpose.msra.mxu0 0.0
    %266 = vmatpush.xpose.msra.mxu0 0.0
    %267 = vmatpush.xpose.msra.mxu0 0.0
    %268 = vmatpush.xpose.msra.mxu0 0.0
    %269 = vmatpush.xpose.msra.mxu0 0.0
    %270 = vmatpush.xpose.msra.mxu0 %v253
    %271 = vmatmul.f32.gmra.mxu0 %v227
    %v272 = vpop.f32.mrf.mxu0
    %v273 = vadd.f32 %v225, %v272
    %274 = vdwg.mxu0
    %vm275 = vcmask 57344
    %v276 = vsel %vm275, %v250, -inf
    %277 = vmax.xlane.f32.xlu0 %v276
    %v278 = vpop.xlane.xlu0 %277
    %v279 = vsel %vm275, %v273, -inf
    %280 = vmax.xlane.f32.xlu0 %v279
    %v281 = vpop.xlane.xlu0 %280
    %v282 = vsub.f32 %v250, %v278
    %v283 = vsub.f32 %v273, %v281
    %v284 = vmul.f32 %v282, 1.442695
    %v285 = vpow.pop %v284
    %v286 = vmul.f32 %v283, 1.442695
    %v287 = vpow.pop %v286
    %v288 = vsel %vm275, %v285, 0.0
    %289 = vadd.xlane.f32.xlu0 %v288
    %v290 = vpop.xlane.xlu0 %289
    %v291 = vsel %vm275, %v287, 0.0
    %292 = vadd.xlane.f32.xlu0 %v291
    %v293 = vpop.xlane.xlu0 %292
    %v294 = vrcp.pop %v290
    %v295 = vmul.f32 %v290, %v294
    %v296 = vsub.f32 1.0, %v295
    %v297 = vmul.f32 %v294, %v296
    %v298 = vadd.f32 %v294, %v297
    %vm299 = vweird.f32 %v290
    %vm300 = vweird.f32 %v294
    %vm301 = vmor %vm299, %vm300
    %v302 = vsel %vm301, %v294, %v298
    %v303 = vand.u32 2147483647, %v290
    %vm304 = vcmp.eq.f32.partialorder %v303, 8.507059e+37
    %v305 = vand.u32 %v290, 2147483648
    %v306 = vor.u32 1.1754944e-38, %v305
    %v307 = vsel %vm304, %v306, %v302
    %v308 = vrcp.pop %v293
    %v309 = vmul.f32 %v293, %v308
    %v310 = vsub.f32 1.0, %v309
    %v311 = vmul.f32 %v308, %v310
    %v312 = vadd.f32 %v308, %v311
    %vm313 = vweird.f32 %v293
    %vm314 = vweird.f32 %v308
    %vm315 = vmor %vm313, %vm314
    %v316 = vsel %vm315, %v308, %v312
    %v317 = vand.u32 2147483647, %v293
    %vm318 = vcmp.eq.f32.partialorder %v317, 8.507059e+37
    %v319 = vand.u32 %v293, 2147483648
    %v320 = vor.u32 1.1754944e-38, %v319
    %v321 = vsel %vm318, %v320, %v316
    %v322 = vmul.f32 %v285, %v307
    %v323 = vmul.f32 %v287, %v321
    %vm324 = vcmask 64512
    %v326 = vsel %vm324, %v322, 0
    %328 = vmatpush.msra.mxu0 0.0
    %329 = vmatpush.msra.mxu0 0.0
    %330 = vmatpush.msra.mxu0 0.0
    %331 = vmatpush.msra.mxu0 0.0
    %332 = vmatpush.msra.mxu0 0.0
    %333 = vmatpush.msra.mxu0 0.0
    %334 = vmatpush.msra.mxu0 0.0
    %335 = vmatpush.msra.mxu0 0.0
    %336 = vmatpush.msra.mxu0 0.0
    %337 = vmatpush.msra.mxu0 0.0
    %338 = vmatpush.msra.mxu0 0.0
    %339 = vmatpush.msra.mxu0 0.0
    %340 = vmatpush.msra.mxu0 0.0
    %341 = vmatpush.msra.mxu0 0.0
    %342 = vmatpush.msra.mxu0 0.0
    %343 = vmatpush.msra.mxu0 %v110
    %344 = vmatmul.f32.gmra.mxu0 %v326
    %v345 = vpop.f32.mrf.mxu0
    %v346 = vadd.f32 0.0, %v345
    %347 = vdwg.mxu0
    %v349 = vsel %vm324, %v323, 0
    %351 = vmatpush.msra.mxu0 0.0
    %352 = vmatpush.msra.mxu0 0.0
    %353 = vmatpush.msra.mxu0 0.0
    %354 = vmatpush.msra.mxu0 0.0
    %355 = vmatpush.msra.mxu0 0.0
    %356 = vmatpush.msra.mxu0 0.0
    %357 = vmatpush.msra.mxu0 0.0
    %358 = vmatpush.msra.mxu0 0.0
    %359 = vmatpush.msra.mxu0 0.0
    %360 = vmatpush.msra.mxu0 0.0
    %361 = vmatpush.msra.mxu0 0.0
    %362 = vmatpush.msra.mxu0 0.0
    %363 = vmatpush.msra.mxu0 0.0
    %364 = vmatpush.msra.mxu0 0.0
    %365 = vmatpush.msra.mxu0 0.0
    %366 = vmatpush.msra.mxu0 %v111
    %367 = vmatmul.f32.gmra.mxu0 %v349
    %v368 = vpop.f32.mrf.mxu0
    %v369 = vadd.f32 0.0, %v368
    %370 = vdwg.mxu0
    %vm371 = vcmask 253952
    %372 = vst.msk [vmem:[#allocation11] sm:$0x1] %vm371, %v346
    %373 = vst.msk [vmem:[#allocation11 + $0x1] sm:$0x1] %vm371, %v369
    %374 = vst.msk [vmem:[#allocation12] sm:$0x1] %vm275, %v322
    %375 = vst.msk [vmem:[#allocation12 + $0x1] sm:$0x1] %vm275, %v323
    // Predicated region
    $region50: #{tpu_custom_call.1} parent=1 // pred_check
      _
    $region51: #{tpu_custom_call.1} parent=1 // pred_check_branch
      %377 = sbr.rel (0) target = $region53
    $region52: #{tpu_custom_call.1} parent=1 // pred_region
      %379 = vsyncadd [#allocation5], 0
      %s380 = sshll.u32 [#allocation11], 4
      %s381 = int_to_ptr.vmem [resolvable:$true] %s380
      %s382 = sshll.u32 %s8, 4
      %s383 = int_to_ptr.hbm [resolvable:$true] %s382
      %388 = dma.vmem_to_hbm [thread:$0]  %s381, 32, %s383, [#allocation5], 16, 16, 1
    $region53: #{tpu_custom_call.1} parent=1 // pred_fallthru
      _
    // Predicated region
    $region54: #{tpu_custom_call.1} parent=1 // pred_check
      _
    $region55: #{tpu_custom_call.1} parent=1 // pred_check_branch
      %390 = sbr.rel (0) target = $region57
    $region56: #{tpu_custom_call.1} parent=1 // pred_region
      %392 = vsyncadd [#allocation13], 0
      %s393 = sshll.u32 [#allocation12], 4
      %s394 = int_to_ptr.vmem [resolvable:$true] %s393
      %s395 = sshll.u32 %s9, 4
      %s396 = int_to_ptr.hbm [resolvable:$true] %s395
      %401 = dma.vmem_to_hbm [thread:$0]  %s394, 32, %s396, [#allocation13], 16, 16, 1
    $region57: #{tpu_custom_call.1} parent=1 // pred_fallthru
      _
    // Predicated region
    $region58: #{tpu_custom_call.1} parent=1 // pred_check
      _
    $region59: #{tpu_custom_call.1} parent=1 // pred_check_branch
      %403 = sbr.rel (0) target = $region61
    $region60: #{tpu_custom_call.1} parent=1 // pred_region
      %405 = dma.done [#allocation5], 32
    $region61: #{tpu_custom_call.1} parent=1 // pred_fallthru
      _
    // Predicated region
    $region62: #{tpu_custom_call.1} parent=1 // pred_check
      _
    $region63: #{tpu_custom_call.1} parent=1 // pred_check_branch
      %407 = sbr.rel (0) target = $region65
    $region64: #{tpu_custom_call.1} parent=1 // pred_region
      %409 = dma.done [#allocation13], 32
    $region65: #{tpu_custom_call.1} parent=1 // pred_fallthru
      _
    %410 = vsyncpa [#allocation4], 1
    %411 = vsyncpa [#allocation7], 1
    %412 = vsyncpa [#allocation10], 1
    %413 = vsyncpa [#allocation5], 1
    %414 = vsyncpa [#allocation13], 1

</llo_original>
